<compile_context>
chip_gen: v6e
topology: v6e:2x2x1
jax: 0.10.0
libtpu: 0.0.40
codegen_flags: <defaults>
</compile_context>

<pallas_src>
import math
import jax
import jax.numpy as jnp
from jax.experimental import pallas as pl
from jax.experimental.pallas import tpu as pltpu

LANES = 128


# ---------------------------------------------------------------------------
# Hardware / dtype aware sizing helpers (safe fallbacks everywhere).
# ---------------------------------------------------------------------------
def _device_kind():
    try:
        return jax.devices()[0].device_kind.lower()
    except Exception:
        return ""


def _target_block_bytes():
    """Per-buffer block-size target.

    Chosen so double-buffered in+out stays well under every generation's
    scoped-VMEM default (16 / 32 / 32 MiB):
      v5e : 1 MiB blocks  (<= 4 MiB of buffers, ~0.82 TB/s HBM)
      v6e : 2 MiB blocks  (<= 8 MiB of buffers, ~1.4 TB/s HBM)
      v7x : 4 MiB blocks  (<= 16 MiB of buffers, ~3.2 TB/s HBM per TC)
    Unknown chips fall back to 2 MiB (still safe under the 16 MiB v5e default).
    """
    kind = _device_kind()
    if "v5e" in kind or "v5 lite" in kind or "v5lite" in kind:
        return 1 << 20
    if "v7" in kind or "tpu7" in kind:
        return 4 << 20
    return 2 << 20


def _num_tensorcores():
    """TensorCores addressable behind one JAX device (megacore / v7x)."""
    kind = _device_kind()
    if "v4" in kind or "v5p" in kind or "v7" in kind or "tpu7" in kind:
        return 2
    return 1


def _sublane_rows(dtype):
    """Native sublane tiling: 8 rows (4-byte), 16 (2-byte), 32 (1-byte)."""
    return max(8, 32 // jnp.dtype(dtype).itemsize)


def _tile_rows(dtype):
    """Rows per block so one block is ~_target_block_bytes() of `dtype`."""
    sub = _sublane_rows(dtype)
    rows = _target_block_bytes() // (LANES * jnp.dtype(dtype).itemsize)
    return max(sub, (rows // sub) * sub)


# ---------------------------------------------------------------------------
# Kernel 1: global aminmax (calibration pass).
#   grid = (split, inner); outer axis "parallel" (feeds the 2nd TC where one
#   exists), inner "arbitrary".  Each block is reduced to a single (grp, 128)
#   vreg with elementwise min/max (VPU only) and folded into a tiny VMEM
#   accumulator; the cross-lane reduce of the (split*grp, 128) partials is done
#   with jnp outside the kernel.  The kernel never sees a partially valid row.
# ---------------------------------------------------------------------------
def _make_aminmax_kernel(grp, acc_dtype):
    def kernel(x_ref, mn_out, mx_out, mn_acc, mx_acc):
        i = pl.program_id(1)

        @pl.when(i == 0)
        def _():
            mn_acc[...] = jnp.full((grp, LANES), jnp.inf, acc_dtype)
            mx_acc[...] = jnp.full((grp, LANES), -jnp.inf, acc_dtype)

        xg = x_ref[...].astype(acc_dtype).reshape(-1, grp, LANES)
        mn_acc[...] = jnp.minimum(mn_acc[...], jnp.min(xg, axis=0))
        mx_acc[...] = jnp.maximum(mx_acc[...], jnp.max(xg, axis=0))

        @pl.when(i == pl.num_programs(1) - 1)
        def _():
            mn_out[...] = mn_acc[...]
            mx_out[...] = mx_acc[...]

    return kernel


def pallas_aminmax(x):
    """Global (min, max) of `x` as float32 scalars via a streaming Pallas scan."""
    flat = x.reshape(-1)
    numel = flat.shape[0]
    in_dtype = x.dtype

    # min/max are exact in any float format, so accumulate in the input dtype
    # for bf16/f16 (1 load + 1 min + 1 max per vreg, no up-converts); f32 else.
    if jnp.dtype(in_dtype) in (jnp.dtype(jnp.float32), jnp.dtype(jnp.bfloat16),
                               jnp.dtype(jnp.float16)):
        acc_dtype = jnp.dtype(in_dtype)
    else:
        acc_dtype = jnp.dtype(jnp.float32)
    grp = _sublane_rows(acc_dtype)
    align = max(grp, _sublane_rows(in_dtype))

    rows_total = numel // LANES
    if rows_total < align:                          # tiny input: plain jnp
        xf = flat.astype(jnp.float32)
        return jnp.min(xf), jnp.max(xf)

    # Balanced tile: ~target-sized blocks leaving only a handful of rows (plus
    # any sub-128 remainder) to a tiny jnp reduction, so no in-kernel masking.
    itemsize = jnp.dtype(in_dtype).itemsize
    target_rows = max(align,
                      (_target_block_bytes() // (LANES * itemsize)) // align * align)
    rows_aligned = (rows_total // align) * align
    nblocks_target = pl.cdiv(rows_aligned, target_rows)
    tile = max(align, (rows_aligned // nblocks_target) // align * align)
    nblocks = rows_total // tile
    rows_kernel = nblocks * tile

    if rows_kernel * LANES == numel:
        x2d = flat.reshape(rows_kernel, LANES)      # free (contiguous)
    elif numel % LANES == 0:
        x2d = flat.reshape(rows_total, LANES)       # free; grid only reads rows_kernel
    else:
        # Truly ragged numel: one bulk copy (rare; <128 elems go to jnp below).
        x2d = flat[: rows_total * LANES].reshape(rows_total, LANES)

    # Outer axis only splits where a second TensorCore actually exists.
    split = 2 if (nblocks >= 2 and _num_tensorcores() >= 2) else 1
    inner = pl.cdiv(nblocks, split)
    if split * inner == nblocks:
        in_map = lambda o, i: (o * inner + i, 0)
    else:
        # Over-provisioned steps just re-read (idempotently re-min) the last block.
        in_map = lambda o, i: (jnp.minimum(o * inner + i, nblocks - 1), 0)
    out_map = lambda o, i: (o, 0)

    mn_p, mx_p = pl.pallas_call(
        _make_aminmax_kernel(grp, acc_dtype),
        out_shape=(jax.ShapeDtypeStruct((split * grp, LANES), acc_dtype),
                   jax.ShapeDtypeStruct((split * grp, LANES), acc_dtype)),
        grid=(split, inner),
        in_specs=[pl.BlockSpec((tile, LANES), in_map)],
        out_specs=(pl.BlockSpec((grp, LANES), out_map),
                   pl.BlockSpec((grp, LANES), out_map)),
        scratch_shapes=[pltpu.VMEM((grp, LANES), acc_dtype),
                        pltpu.VMEM((grp, LANES), acc_dtype)],
        compiler_params=pltpu.CompilerParams(
            dimension_semantics=("parallel", "arbitrary")),
    )(x2d)

    mn = jnp.min(mn_p.astype(jnp.float32))
    mx = jnp.max(mx_p.astype(jnp.float32))

    if rows_kernel * LANES != numel:                # small leftover via jnp
        tail = flat[rows_kernel * LANES:].astype(jnp.float32)
        mn = jnp.minimum(mn, jnp.min(tail))
        mx = jnp.maximum(mx, jnp.max(tail))
    return mn, mx


# ---------------------------------------------------------------------------
# Kernel 2: fake-quantize with fixed (min, max):
#   q = floor(x * scale + bias) * inv_scale + min
# with scale = n/(max-min), bias = 0.5 - min*scale, inv_scale = (max-min)/n all
# precomputed in the wrapper (no vector divides, folded rounding bias).
# Scalars live in SMEM; output is written directly in the original dtype.
# ---------------------------------------------------------------------------
def _make_quant_kernel(bits):
    if bits == 1:
        def kernel(x_ref, o_ref):
            x = x_ref[...].astype(jnp.float32)
            o_ref[...] = (jnp.sign(x) - 1.0).astype(o_ref.dtype)
        return kernel

    def kernel(params_ref, x_ref, o_ref):
        scale = params_ref[0]        # n / (max - min)
        bias = params_ref[1]         # 0.5 - min * scale
        inv_scale = params_ref[2]    # (max - min) / n
        min_val = params_ref[3]
        x = x_ref[...].astype(jnp.float32)
        q = jnp.floor(x * scale + bias) * inv_scale + min_val
        o_ref[...] = q.astype(o_ref.dtype)

    return kernel


def _jnp_quantize(v, bits, params):
    """Same math as the kernel, used for tiny inputs / sub-128 ragged tails."""
    vf = v.astype(jnp.float32)
    if bits == 1:
        q = jnp.sign(vf) - 1.0
    else:
        q = jnp.floor(vf * params[0] + params[1]) * params[2] + params[3]
    return q.astype(v.dtype)


def pallas_min_max_quantize(x, bits, min_val=None, max_val=None):
    assert bits >= 1, bits
    if x.size == 0:
        return x
    orig_shape, orig_dtype = x.shape, x.dtype

    if bits == 1:
        params = None
    else:
        if min_val is None or max_val is None:
            min_val, max_val = pallas_aminmax(x)
        mn = jnp.asarray(min_val, jnp.float32)
        mx = jnp.asarray(max_val, jnp.float32)
        n = float(2.0 ** bits - 1.0)
        rng = mx - mn
        rng = jnp.where(rng == 0.0, jnp.float32(1.0), rng)    # guard max == min
        scale = n / rng
        params = jnp.stack([scale, 0.5 - mn * scale, rng / n, mn]).astype(jnp.float32)

    flat = x.reshape(-1)
    numel = flat.shape[0]
    sub = _sublane_rows(orig_dtype)
    rows_total = numel // LANES

    if rows_total < sub:                             # tiny input: plain jnp
        return _jnp_quantize(flat, bits, params).reshape(orig_shape)

    tile = min(_tile_rows(orig_dtype), (rows_total // sub) * sub)
    bulk_n = rows_total * LANES
    if bulk_n == numel:
        x2d = flat.reshape(rows_total, LANES)        # free (contiguous), no pad
    else:
        # Ragged (<128-element) tail: kernel handles the 128-lane bulk, the tail
        # is quantized with jnp below (rare; costs one bulk copy + concat).
        x2d = flat[:bulk_n].reshape(rows_total, LANES)

    kernel = _make_quant_kernel(bits)
    block_spec = pl.BlockSpec((tile, LANES), lambda i: (i, 0))
    if bits == 1:
        in_specs, args = [block_spec], (x2d,)
    else:
        in_specs = [pl.BlockSpec(memory_space=pltpu.MemorySpace.SMEM), block_spec]
        args = (params, x2d)

    out2d = pl.pallas_call(
        kernel,
        out_shape=jax.ShapeDtypeStruct((rows_total, LANES), orig_dtype),
        grid=(pl.cdiv(rows_total, tile),),
        in_specs=in_specs,
        out_specs=pl.BlockSpec((tile, LANES), lambda i: (i, 0)),
        compiler_params=pltpu.CompilerParams(dimension_semantics=("parallel",)),
    )(*args)

    out_flat = out2d.reshape(-1)
    if bulk_n != numel:
        out_flat = jnp.concatenate(
            [out_flat, _jnp_quantize(flat[bulk_n:], bits, params)])
    return out_flat.reshape(orig_shape)


# ---------------------------------------------------------------------------
# Module wrapper mirroring MovingAvgMinMaxQuant forward semantics.
# ---------------------------------------------------------------------------
class MovingAvgMinMaxQuant:
    def __init__(self, name, bits, counter, **kwargs):
        self.name = name
        self.bits = bits
        self._counter = counter
        self.min_val = None
        self.max_val = None
        self.averaging_constant = 0.01

    @property
    def counter(self):
        return self._counter

    def __call__(self, x_orig):
        if self._counter > 0:
            # calibration: observe stats, pass activations through unchanged
            self._counter -= len(x_orig)
            if x_orig.size == 0:
                return x_orig
            min_cur, max_cur = pallas_aminmax(x_orig)
            if self.min_val is not None:
                self.min_val = self.min_val + self.averaging_constant * (
                    min_cur - self.min_val)
            else:
                self.min_val = jnp.asarray(min_cur, jnp.float32)
            if self.max_val is not None:
                self.max_val = self.max_val + self.averaging_constant * (
                    max_cur - self.max_val)
            else:
                self.max_val = jnp.asarray(max_cur, jnp.float32)
            return x_orig
        else:
            # quantize with the (frozen) moving-average min/max
            return pallas_min_max_quantize(
                x_orig, self.bits, self.min_val, self.max_val)


# ---------------------------------------------------------------------------
# Pure-jnp reference + tolerant checker (tolerates rare 1-step floor-tie flips).
# ---------------------------------------------------------------------------
def _ref_min_max_quantize(x, bits, min_val, max_val):
    if bits == 1:
        return jnp.sign(x) - 1.0
    n = math.pow(2.0, bits) - 1.0
    mn = jnp.asarray(min_val, jnp.float32)
    mx = jnp.asarray(max_val, jnp.float32)
    rng = jnp.where(mx - mn == 0.0, 1.0, mx - mn)
    xi = jnp.floor((x.astype(jnp.float32) - mn) * (n / rng) + 0.5)
    return xi * (rng / n) + mn


def _check_quant(y, x, bits, mn, mx):
    ref = _ref_min_max_quantize(x, bits, mn, mx)
    n = 2.0 ** bits - 1.0
    step = (jnp.asarray(mx, jnp.float32) - jnp.asarray(mn, jnp.float32)) / n
    diff = jnp.abs(y.astype(jnp.float32) - ref.astype(jnp.float32))
    assert float(jnp.max(diff)) <= abs(float(step)) * 1.001 + 1e-6
    mismatch_frac = float(jnp.mean((diff > 1e-5).astype(jnp.float32)))
    assert mismatch_frac < 5e-3, mismatch_frac


if __name__ == "__main__":
    key = jax.random.PRNGKey(0)
    # NCHW activations, as the PyTorch module would see from a conv.
    x = jax.random.normal(key, (2, 4, 16, 16), dtype=jnp.float32)

    quant = MovingAvgMinMaxQuant(name="act_quant", bits=8, counter=2)

    # Pass 1: calibration (counter > 0) — returns x unchanged, records min/max.
    y_calib = quant(x)
    jax.block_until_ready(y_calib)
    assert quant.counter <= 0
    assert jnp.array_equal(y_calib, x)
    assert jnp.allclose(quant.min_val, jnp.min(x))
    assert jnp.allclose(quant.max_val, jnp.max(x))

    # Pass 2: quantization (counter <= 0) — fake-quant with recorded min/max.
    x2 = jax.random.normal(jax.random.PRNGKey(1), (2, 4, 16, 16), jnp.float32)
    y_quant = quant(x2)
    jax.block_until_ready(y_quant)
    _check_quant(y_quant, x2, 8, quant.min_val, quant.max_val)

    # Larger, non-tile-aligned input (2*8*130*128 = 266240 elems -> 2080 rows).
    x3 = jax.random.normal(jax.random.PRNGKey(2), (2, 8, 130, 128), jnp.float32)
    mn3, mx3 = pallas_aminmax(x3)
    assert jnp.allclose(mn3, jnp.min(x3)) and jnp.allclose(mx3, jnp.max(x3))
    y3 = pallas_min_max_quantize(x3, 8, mn3, mx3)
    jax.block_until_ready(y3)
    _check_quant(y3, x3, 8, mn3, mx3)

    # Ragged size (not a multiple of 128) exercising the bulk + jnp-tail path.
    x4 = jax.random.normal(jax.random.PRNGKey(3), (3, 5, 7, 11), jnp.float32)
    mn4, mx4 = pallas_aminmax(x4)
    assert jnp.allclose(mn4, jnp.min(x4)) and jnp.allclose(mx4, jnp.max(x4))
    y4 = pallas_min_max_quantize(x4, 8, mn4, mx4)
    jax.block_until_ready(y4)
    _check_quant(y4, x4, 8, mn4, mx4)

    # bf16 path (dtype-aware tiling + native-dtype aminmax accumulation).
    x5 = jax.random.normal(jax.random.PRNGKey(4), (2, 4, 16, 16), jnp.bfloat16)
    mn5, mx5 = pallas_aminmax(x5)
    assert jnp.allclose(mn5, jnp.min(x5).astype(jnp.float32))
    assert jnp.allclose(mx5, jnp.max(x5).astype(jnp.float32))
    y5 = pallas_min_max_quantize(x5, 8, mn5, mx5)
    jax.block_until_ready(y5)
    ref5 = _ref_min_max_quantize(x5.astype(jnp.float32), 8, mn5, mx5)
    step5 = (mx5 - mn5) / 255.0
    assert float(jnp.max(jnp.abs(y5.astype(jnp.float32) - ref5))) <= float(step5) + 0.05

    # 1-bit path (sign-based, no aminmax scan).
    y1 = pallas_min_max_quantize(x2, 1)
    jax.block_until_ready(y1)
    assert jnp.allclose(y1, jnp.sign(x2) - 1.0)

    print("KERNEL_OK")
</pallas_src>

<mosaic_0001>
module attributes {stable_mosaic.version = 11 : i64} {
  func.func @kernel(%arg0: i32, %arg1: i32, %arg2: memref<16x128xf32, #tpu.memory_space<vmem>>, %arg3: memref<8x128xf32, #tpu.memory_space<vmem>>, %arg4: memref<8x128xf32, #tpu.memory_space<vmem>>, %arg5: memref<8x128xf32, #tpu.memory_space<vmem>>, %arg6: memref<8x128xf32, #tpu.memory_space<vmem>>) attributes {dimension_semantics = [#tpu.dimension_semantics<parallel>, #tpu.dimension_semantics<arbitrary>], iteration_bounds = array<i64: 1, 1>, scalar_prefetch = 0 : i64, scratch_operands = 2 : i64, tpu.core_type = #tpu.core_type<tc>, window_params = [{transform_indices = @transform_0, window_bounds = array<i64: 16, 128>}, {transform_indices = @transform_1, window_bounds = array<i64: 8, 128>}, {transform_indices = @transform_2, window_bounds = array<i64: 8, 128>}]} {
    %c0_i32 = arith.constant 0 : i32
    %0 = arith.cmpi eq, %arg1, %c0_i32 : i32
    %1 = arith.extui %0 : i1 to i32
    %c0_i32_0 = arith.constant 0 : i32
    %2 = arith.cmpi ne, %1, %c0_i32_0 : i32
    scf.if %2 {
      %cst_13 = arith.constant 0x7F800000 : f32
      %16 = vector.broadcast %cst_13 : f32 to vector<8x128xf32>
      %c0_14 = arith.constant 0 : index
      %c0_15 = arith.constant 0 : index
      %17 = vector.load %arg5[%c0_14, %c0_15] : memref<8x128xf32, #tpu.memory_space<vmem>>, vector<8x128xf32>
      tpu.vector_store %arg5[%c0_14, %c0_15], %16 {strides = array<i32>} : memref<8x128xf32, #tpu.memory_space<vmem>>, vector<8x128xf32>,
      %cst_16 = arith.constant 0xFF800000 : f32
      %18 = vector.broadcast %cst_16 : f32 to vector<8x128xf32>
      %c0_17 = arith.constant 0 : index
      %c0_18 = arith.constant 0 : index
      %19 = vector.load %arg6[%c0_17, %c0_18] : memref<8x128xf32, #tpu.memory_space<vmem>>, vector<8x128xf32>
      tpu.vector_store %arg6[%c0_17, %c0_18], %18 {strides = array<i32>} : memref<8x128xf32, #tpu.memory_space<vmem>>, vector<8x128xf32>,
    } else {
    }
    %c0 = arith.constant 0 : index
    %c0_1 = arith.constant 0 : index
    %3 = vector.load %arg2[%c0, %c0_1] : memref<16x128xf32, #tpu.memory_space<vmem>>, vector<16x128xf32>
    %4 = vector.shape_cast %3 : vector<16x128xf32> to vector<2x8x128xf32>
    %c0_2 = arith.constant 0 : index
    %c0_3 = arith.constant 0 : index
    %5 = vector.load %arg5[%c0_2, %c0_3] : memref<8x128xf32, #tpu.memory_space<vmem>>, vector<8x128xf32>
    %cst = arith.constant dense<0x7F800000> : vector<8x128xf32>
    %6 = vector.multi_reduction <minimumf>, %4, %cst [0] : vector<2x8x128xf32> to vector<8x128xf32>
    %7 = arith.minimumf %5, %6 : vector<8x128xf32>
    %c0_4 = arith.constant 0 : index
    %c0_5 = arith.constant 0 : index
    %8 = vector.load %arg5[%c0_4, %c0_5] : memref<8x128xf32, #tpu.memory_space<vmem>>, vector<8x128xf32>
    tpu.vector_store %arg5[%c0_4, %c0_5], %7 {strides = array<i32>} : memref<8x128xf32, #tpu.memory_space<vmem>>, vector<8x128xf32>,
    %c0_6 = arith.constant 0 : index
    %c0_7 = arith.constant 0 : index
    %9 = vector.load %arg6[%c0_6, %c0_7] : memref<8x128xf32, #tpu.memory_space<vmem>>, vector<8x128xf32>
    %cst_8 = arith.constant dense<0xFF800000> : vector<8x128xf32>
    %10 = vector.multi_reduction <maximumf>, %4, %cst_8 [0] : vector<2x8x128xf32> to vector<8x128xf32>
    %11 = arith.maximumf %9, %10 : vector<8x128xf32>
    %c0_9 = arith.constant 0 : index
    %c0_10 = arith.constant 0 : index
    %12 = vector.load %arg6[%c0_9, %c0_10] : memref<8x128xf32, #tpu.memory_space<vmem>>, vector<8x128xf32>
    tpu.vector_store %arg6[%c0_9, %c0_10], %11 {strides = array<i32>} : memref<8x128xf32, #tpu.memory_space<vmem>>, vector<8x128xf32>,
    %c0_i32_11 = arith.constant 0 : i32
    %13 = arith.cmpi eq, %arg1, %c0_i32_11 : i32
    %14 = arith.extui %13 : i1 to i32
    %c0_i32_12 = arith.constant 0 : i32
    %15 = arith.cmpi ne, %14, %c0_i32_12 : i32
    scf.if %15 {
      %c0_13 = arith.constant 0 : index
      %c0_14 = arith.constant 0 : index
      %16 = vector.load %arg5[%c0_13, %c0_14] : memref<8x128xf32, #tpu.memory_space<vmem>>, vector<8x128xf32>
      %c0_15 = arith.constant 0 : index
      %c0_16 = arith.constant 0 : index
      %17 = vector.load %arg3[%c0_15, %c0_16] : memref<8x128xf32, #tpu.memory_space<vmem>>, vector<8x128xf32>
      tpu.vector_store %arg3[%c0_15, %c0_16], %16 {strides = array<i32>} : memref<8x128xf32, #tpu.memory_space<vmem>>, vector<8x128xf32>,
      %c0_17 = arith.constant 0 : index
      %c0_18 = arith.constant 0 : index
      %18 = vector.load %arg6[%c0_17, %c0_18] : memref<8x128xf32, #tpu.memory_space<vmem>>, vector<8x128xf32>
      %c0_19 = arith.constant 0 : index
      %c0_20 = arith.constant 0 : index
      %19 = vector.load %arg4[%c0_19, %c0_20] : memref<8x128xf32, #tpu.memory_space<vmem>>, vector<8x128xf32>
      tpu.vector_store %arg4[%c0_19, %c0_20], %18 {strides = array<i32>} : memref<8x128xf32, #tpu.memory_space<vmem>>, vector<8x128xf32>,
    } else {
    }
    return
  }
  func.func @transform_0(%arg0: i32, %arg1: i32) -> (i32, i32) {
    %c1_i32 = arith.constant 1 : i32
    %0 = arith.muli %arg0, %c1_i32 : i32
    %1 = arith.addi %0, %arg1 : i32
    %c0_i32 = arith.constant 0 : i32
    %c0_i32_0 = arith.constant 0 : i32
    return %1, %c0_i32 : i32, i32
  }
  func.func @transform_1(%arg0: i32, %arg1: i32) -> (i32, i32) {
    %c0_i32 = arith.constant 0 : i32
    %c0_i32_0 = arith.constant 0 : i32
    return %arg0, %c0_i32 : i32, i32
  }
  func.func @transform_2(%arg0: i32, %arg1: i32) -> (i32, i32) {
    %c0_i32 = arith.constant 0 : i32
    %c0_i32_0 = arith.constant 0 : i32
    return %arg0, %c0_i32 : i32, i32
  }
}

</mosaic_0001>

<llo_original>
// kernel: tpu_custom_call.1
$region0: #{tpu_custom_call.1}
  #allocation0 [shape = 'u32[]', space=smem, size = 0x4, offset = 0x4, fixed_abs, tag = 'smem constant byte address 0x4 - core index']
  #allocation1 [shape = 'u32[144,128]{1,0:T(1,128)}', space=vmem, size = 0x12000, scoped, tag = 'internal scratch']
  #allocation2 [shape = 'f32[8,128]{1,0:T(8,128)}', space=vmem, size = 0x1000, scoped, tag = 'scratch operand']
  #allocation3 [shape = 'f32[8,128]{1,0:T(8,128)}', space=vmem, size = 0x1000, scoped, tag = 'scratch operand']
  %s0 = inlined_call_operand.hbm [shape: f32[16,128], index: 0, kind: input, shape index: {}]
  %s1 = inlined_call_operand.hbm [shape: f32[8,128], index: 1, kind: output, shape index: {0}]
  %s2 = inlined_call_operand.hbm [shape: f32[8,128], index: 2, kind: output, shape index: {1}]
  %3 = xla_tuple %s1, %s2
  %s4 = sld [smem:[#allocation0]]
  $region34: #{tpu_custom_call.1} parent=0
    _
  %s6 = ssub.s32 1, %s4
  %s7 = scalar_select 0, %s6, %s4
  $region1: #{tpu_custom_call.1} parent=0
    #allocation4 [shape = 'u8[8192]{0}', space=vmem, size = 0x2000, scoped, tag = 'input window, operand 0, single buffered']
    #allocation5 [shape = 's32[1]{0}', space=sflag, size = 0x4, scoped, tag = 'scoped memory for tpu_custom_call.1']
    #allocation6 [shape = 's32[1]{0}', space=sflag, size = 0x4, scoped, tag = 'scoped memory for tpu_custom_call.1']
    #allocation7 [shape = 'u8[4096]{0}', space=vmem, size = 0x1000, scoped, tag = 'output window, operand 0, single buffered']
    #allocation8 [shape = 'u8[4096]{0}', space=vmem, size = 0x1000, scoped, tag = 'output window, operand 1, single buffered']
    #allocation9 [shape = 's32[1]{0}', space=sflag, size = 0x4, scoped, tag = 'scoped memory for tpu_custom_call.1']
    %8 = vsyncpa [#allocation5], 0
    %9 = vsyncpa [#allocation6], 0
    %10 = vsyncpa [#allocation9], 0
    // Predicated region
    $region2: #{tpu_custom_call.1} parent=1 // pred_check
      _
    $region3: #{tpu_custom_call.1} parent=1 // pred_check_branch
      %12 = sbr.rel (0) target = $region5
    $region4: #{tpu_custom_call.1} parent=1 // pred_region
      %s13 = sadd.s32 0, 0
      %s14 = smul.u32 2, %s13
      %s16 = ssub.s32 256, 256
      %17 = vsyncadd [#allocation5], %s16
      %s18 = smul.addr %s14, 128
      %s19 = scalar_lea.hbm %s0, %s18
      %s20 = sshll.u32 [#allocation4], 4
      %s21 = int_to_ptr.vmem [resolvable:$true] %s20
      %26 = dma.hbm_to_vmem [thread:$0]  %s19, 256, %s21, [#allocation5], 128, 128, 8
    $region5: #{tpu_custom_call.1} parent=1 // pred_fallthru
      _
    // Predicated region
    $region6: #{tpu_custom_call.1} parent=1 // pred_check
      _
    $region7: #{tpu_custom_call.1} parent=1 // pred_check_branch
      %28 = sbr.rel (0) target = $region9
    $region8: #{tpu_custom_call.1} parent=1 // pred_region
      %29 = dma.done [#allocation5], 256
    $region9: #{tpu_custom_call.1} parent=1 // pred_fallthru
      _
    %s30 = sadd.s32 0, 0
    %s31 = smul.u32 2, %s30
    %p32 = scmp.eq.s32.totalorder 0, 0
    // Predicated region
    $region10: #{tpu_custom_call.1} parent=1 // pred_check
      %p33 = pneg %p32
    $region11: #{tpu_custom_call.1} parent=1 // pred_check_branch
      %35 = sbr.rel (%p33) target = $region13
    $region12: #{tpu_custom_call.1} parent=1 // pred_region
      %36 = vst [vmem:[#allocation2] sm:$0xff] inf
      %37 = vst [vmem:[#allocation3] sm:$0xff] -inf
    $region13: #{tpu_custom_call.1} parent=1 // pred_fallthru
      _
    %v38 = vld [vmem:[#allocation4] sm:$0xff]
    %v39 = vld [vmem:[#allocation4 + $0x8] sm:$0xff]
    %v40 = vld [vmem:[#allocation2] sm:$0xff]
    %v41 = vmin.f32 %v38, %v39
    %v42 = vmin.f32 %v40, %v41
    %43 = vst [vmem:[#allocation2] sm:$0xff] %v42
    %v44 = vld [vmem:[#allocation3] sm:$0xff]
    %v45 = vmax.f32 %v38, %v39
    %v46 = vmax.f32 %v44, %v45
    %47 = vst [vmem:[#allocation3] sm:$0xff] %v46
    // Predicated region
    $region14: #{tpu_custom_call.1} parent=1 // pred_check
      %p48 = pneg %p32
    $region15: #{tpu_custom_call.1} parent=1 // pred_check_branch
      %50 = sbr.rel (%p48) target = $region17
    $region16: #{tpu_custom_call.1} parent=1 // pred_region
      %v51 = vld [vmem:[#allocation2] sm:$0xff]
      %52 = vst [vmem:[#allocation7] sm:$0xff] %v51
      %v53 = vld [vmem:[#allocation3] sm:$0xff]
      %54 = vst [vmem:[#allocation8] sm:$0xff] %v53
    $region17: #{tpu_custom_call.1} parent=1 // pred_fallthru
      _
    // Predicated region
    $region18: #{tpu_custom_call.1} parent=1 // pred_check
      _
    $region19: #{tpu_custom_call.1} parent=1 // pred_check_branch
      %56 = sbr.rel (0) target = $region21
    $region20: #{tpu_custom_call.1} parent=1 // pred_region
      %s58 = ssub.s32 128, 128
      %59 = vsyncadd [#allocation6], %s58
      %s61 = sshll.u32 [#allocation7], 4
      %s62 = int_to_ptr.vmem [resolvable:$true] %s61
      %64 = dma.vmem_to_hbm [thread:$0]  %s62, 128, %s1, [#allocation6]
    $region21: #{tpu_custom_call.1} parent=1 // pred_fallthru
      _
    // Predicated region
    $region22: #{tpu_custom_call.1} parent=1 // pred_check
      _
    $region23: #{tpu_custom_call.1} parent=1 // pred_check_branch
      %66 = sbr.rel (0) target = $region25
    $region24: #{tpu_custom_call.1} parent=1 // pred_region
      %s68 = ssub.s32 128, 128
      %69 = vsyncadd [#allocation9], %s68
      %s71 = sshll.u32 [#allocation8], 4
      %s72 = int_to_ptr.vmem [resolvable:$true] %s71
      %74 = dma.vmem_to_hbm [thread:$0]  %s72, 128, %s2, [#allocation9]
    $region25: #{tpu_custom_call.1} parent=1 // pred_fallthru
      _
    // Predicated region
    $region26: #{tpu_custom_call.1} parent=1 // pred_check
      _
    $region27: #{tpu_custom_call.1} parent=1 // pred_check_branch
      %76 = sbr.rel (0) target = $region29
    $region28: #{tpu_custom_call.1} parent=1 // pred_region
      %77 = dma.done [#allocation6], 128
    $region29: #{tpu_custom_call.1} parent=1 // pred_fallthru
      _
    // Predicated region
    $region30: #{tpu_custom_call.1} parent=1 // pred_check
      _
    $region31: #{tpu_custom_call.1} parent=1 // pred_check_branch
      %79 = sbr.rel (0) target = $region33
    $region32: #{tpu_custom_call.1} parent=1 // pred_region
      %80 = dma.done [#allocation9], 128
    $region33: #{tpu_custom_call.1} parent=1 // pred_fallthru
      _
    %81 = vsyncpa [#allocation5], 1
    %82 = vsyncpa [#allocation6], 1
    %83 = vsyncpa [#allocation9], 1

</llo_original>
